<compile_context>
chip_gen: v7x
topology: tpu7x:2x2x1
jax: 0.10.0
libtpu: 0.0.40
codegen_flags: <defaults>
</compile_context>

<pallas_src>
import functools

import jax
import jax.numpy as jnp
from jax.experimental import pallas as pl
from jax.experimental.pallas import tpu as pltpu

_LANES = 128


def _round_up(v, m):
    return ((v + m - 1) // m) * m


def _detect_tensorcores():
    """Best-effort TensorCores-per-chip (2 on v7x, 1 on v5e/v6e); safe fallback 1."""
    try:
        info = pltpu.get_tpu_info()
        for name in ("num_tensorcores", "num_tensor_cores",
                     "tensorcores_per_chip", "tensor_cores_per_chip",
                     "num_cores_per_chip", "cores_per_chip"):
            v = getattr(info, name, None)
            if isinstance(v, int) and 1 <= v <= 8:
                return v
    except Exception:
        pass
    return 1


def _focal_loss_kernel(x_ref, t_ref, o_ref, *, alpha, gamma, block_rows,
                       blocks_per_core, n_valid, needs_mask):
    c = pl.program_id(0)          # core axis
    i = pl.program_id(1)          # streaming / reduction axis

    @pl.when(i == 0)
    def _init():
        o_ref[...] = jnp.zeros_like(o_ref)

    x = x_ref[...].astype(jnp.float32)    # logits
    t = t_ref[...].astype(jnp.float32)    # targets in {0, 1}

    # Stable binary_cross_entropy_with_logits: one exp + one log1p on the EUP.
    z = jnp.exp(-jnp.abs(x))
    bce = jnp.maximum(x, 0.0) - x * t + jnp.log1p(z)

    # pt = exp(-bce) without a third transcendental:
    #   exp(-bce) = exp(x*t - max(x,0)) / (1 + z),
    #   exp(x*t - max(x,0)) is 1 when (x>0) matches t, else z   (t in {0,1}).
    d = 1.0 + z
    r = pl.reciprocal(d, approx=True)     # cheap EUP vrcp
    r = r * (2.0 - d * r)                 # Newton step 1 (VPU)
    r = r * (2.0 - d * r)                 # Newton step 2 -> ~f32-exact 1/(1+z)
    num = jnp.where(t > 0.5,
                    jnp.where(x > 0.0, 1.0, z),
                    jnp.where(x > 0.0, z, 1.0))
    pt = num * r
    q = 1.0 - pt

    # at = [alpha, 1-alpha].gather(targets): alpha for class 0, 1-alpha for 1.
    at = alpha + (1.0 - 2.0 * alpha) * t

    g = float(gamma)
    if g == 0.0:
        f = at * bce
    elif g.is_integer() and 1.0 <= g <= 16.0:
        w = q
        for _ in range(int(g) - 1):       # integer gamma: pure VPU multiplies
            w = w * q
        f = at * w * bce
    else:
        f = at * (q ** g) * bce           # non-integer gamma: pow path

    def _acc(vals):
        # (br,128) -> (br//8, 8, 128) keeps every (8,128) tile intact, so the
        # axis-0 sum is plain vreg adds into the (8,128) resident accumulator.
        o_ref[...] += jnp.sum(vals.reshape(block_rows // 8, 8, _LANES), axis=0)

    if not needs_mask:
        _acc(f)                           # grid exactly covers the data
    else:
        block_elems = block_rows * _LANES
        gblock = c * blocks_per_core + i
        # Block-relative remaining-valid count (avoids a global flat index).
        # TODO(synk): widen to 64-bit if N >= 2**31 elements must be supported.
        rem = n_valid - gblock * block_elems

        @pl.when(rem >= block_elems)
        def _full_block():
            _acc(f)

        @pl.when(rem < block_elems)
        def _partial_block():
            row = jax.lax.broadcasted_iota(jnp.int32, (block_rows, _LANES), 0)
            lane = jax.lax.broadcasted_iota(jnp.int32, (block_rows, _LANES), 1)
            local = row * _LANES + lane
            # select AFTER the math so garbage/NaN from the partial block's
            # out-of-bounds region never reaches the accumulator.
            _acc(jnp.where(local < rem, f, 0.0))


def focal_loss(inputs, targets, alpha=0.25, gamma=2, *,
               block_rows=2048, num_cores=None):
    """Pallas implementation of FocalLoss.forward (returns the scalar mean)."""
    x = jnp.ravel(inputs)
    t = jnp.ravel(targets)
    n = x.size
    if n == 0:
        return jnp.asarray(jnp.nan, dtype=jnp.float32)   # torch mean([]) == nan

    if num_cores is None:
        num_cores = _detect_tensorcores()
    num_cores = max(1, int(num_cores))

    # Pad only to the next lane multiple (<=127 elements) so the flat stream
    # can be viewed as (rows, 128); lane-aligned inputs take the no-copy path.
    rows = pl.cdiv(n, _LANES)
    pad = rows * _LANES - n
    if pad:
        x = jnp.pad(x, (0, pad))
        t = jnp.pad(t, (0, pad))
    x2 = x.reshape(rows, _LANES)
    t2 = t.reshape(rows, _LANES)          # native dtype (bf16/int8 halves traffic)

    # Block rows: multiple of 32 (covers f32/bf16/int8 sublane tiling), big
    # enough to hide the ~0.35us/step overhead, small enough that
    # 2 inputs x 2 buffers stays ~2-4 MiB of VMEM on every generation.
    rows_per_core = pl.cdiv(rows, num_cores)
    br = max(32, min(_round_up(block_rows, 32), _round_up(rows_per_core, 32)))
    real_blocks = pl.cdiv(rows, br)
    total_blocks = _round_up(real_blocks, num_cores)
    blocks_per_core = total_blocks // num_cores
    last_block = real_blocks - 1
    needs_mask = total_blocks * br * _LANES != n

    kernel = functools.partial(
        _focal_loss_kernel, alpha=float(alpha), gamma=gamma, block_rows=br,
        blocks_per_core=blocks_per_core, n_valid=n, needs_mask=needs_mask)

    def data_map(c, i):
        # Clamp so blocks added by the num_cores round-up never DMA out of
        # bounds; their (duplicate) data is fully masked out in-kernel.
        return (jnp.minimum(c * blocks_per_core + i, last_block), 0)

    if num_cores > 1 and hasattr(pltpu, "CORE_PARALLEL"):
        dims = (pltpu.CORE_PARALLEL, pltpu.ARBITRARY)   # real 2-TC split (v7x)
    elif num_cores > 1:
        dims = ("parallel", "arbitrary")
    else:
        dims = ("arbitrary", "arbitrary")

    partials = pl.pallas_call(
        kernel,
        out_shape=jax.ShapeDtypeStruct((num_cores * 8, _LANES), jnp.float32),
        grid_spec=pltpu.PrefetchScalarGridSpec(
            num_scalar_prefetch=0,
            grid=(num_cores, blocks_per_core),
            in_specs=[
                pl.BlockSpec((br, _LANES), data_map),
                pl.BlockSpec((br, _LANES), data_map),
            ],
            out_specs=pl.BlockSpec((8, _LANES), lambda c, i: (c, 0)),
        ),
        compiler_params=pltpu.CompilerParams(dimension_semantics=dims),
    )(x2, t2)

    # Tiny epilogue: (8*num_cores, 128) cross-sublane/lane reduce + mean.
    return jnp.sum(partials) / n


def _focal_loss_ref(inputs, targets, alpha=0.25, gamma=2):
    x = jnp.ravel(inputs).astype(jnp.float32)
    t = jnp.ravel(targets).astype(jnp.float32)
    bce = jnp.maximum(x, 0.0) - x * t + jnp.log1p(jnp.exp(-jnp.abs(x)))
    at = jnp.where(t > 0.5, 1.0 - alpha, alpha)
    pt = jnp.exp(-bce)
    return jnp.mean(at * (1.0 - pt) ** gamma * bce)


if __name__ == "__main__":
    key = jax.random.PRNGKey(0)
    k1, k2 = jax.random.split(key)

    # Case 1: N not a multiple of 128 (exercises the in-kernel partial-block
    # mask) with bf16 targets (narrow HBM stream) and f32 logits.
    n = 1000
    inputs = jax.random.normal(k1, (n,), dtype=jnp.float32) * 2.0
    targets = jax.random.bernoulli(k2, 0.5, (n,)).astype(jnp.bfloat16)
    loss = jax.block_until_ready(focal_loss(inputs, targets))
    ref = jax.block_until_ready(_focal_loss_ref(inputs, targets))
    assert jnp.allclose(loss, ref, rtol=1e-4, atol=1e-6), (loss, ref)

    # Case 2: lane-aligned 2D input (no wrapper pad/copy), f32 targets, gamma=3.
    inputs2 = jax.random.normal(k1, (16, 128), dtype=jnp.float32)
    targets2 = jax.random.bernoulli(k2, 0.5, (16, 128)).astype(jnp.float32)
    loss2 = jax.block_until_ready(focal_loss(inputs2, targets2, gamma=3))
    ref2 = jax.block_until_ready(_focal_loss_ref(inputs2, targets2, gamma=3))
    assert jnp.allclose(loss2, ref2, rtol=1e-4, atol=1e-6), (loss2, ref2)

    print("KERNEL_OK")
</pallas_src>

<mosaic_0001>
module attributes {stable_mosaic.version = 11 : i64} {
  func.func @_focal_loss_kernel(%arg0: i32, %arg1: i32, %arg2: memref<32x128xf32, #tpu.memory_space<vmem>>, %arg3: memref<32x128xbf16, #tpu.memory_space<vmem>>, %arg4: memref<8x128xf32, #tpu.memory_space<vmem>>) attributes {dimension_semantics = [#tpu.dimension_semantics<arbitrary>, #tpu.dimension_semantics<arbitrary>], iteration_bounds = array<i64: 1, 1>, scalar_prefetch = 0 : i64, scratch_operands = 0 : i64, tpu.core_type = #tpu.core_type<tc>, window_params = [{transform_indices = @transform_0, window_bounds = array<i64: 32, 128>}, {transform_indices = @transform_1, window_bounds = array<i64: 32, 128>}, {transform_indices = @transform_2, window_bounds = array<i64: 8, 128>}]} {
    %c0_i32 = arith.constant 0 : i32
    %0 = arith.cmpi eq, %arg1, %c0_i32 : i32
    %1 = arith.extui %0 : i1 to i32
    %c0_i32_0 = arith.constant 0 : i32
    %2 = arith.cmpi ne, %1, %c0_i32_0 : i32
    scf.if %2 {
      %cst_20 = arith.constant 0.000000e+00 : f32
      %58 = vector.broadcast %cst_20 : f32 to vector<8x128xf32>
      %c0_21 = arith.constant 0 : index
      %c0_22 = arith.constant 0 : index
      %59 = vector.load %arg4[%c0_21, %c0_22] : memref<8x128xf32, #tpu.memory_space<vmem>>, vector<8x128xf32>
      tpu.vector_store %arg4[%c0_21, %c0_22], %58 {strides = array<i32>} : memref<8x128xf32, #tpu.memory_space<vmem>>, vector<8x128xf32>,
    } else {
    }
    %c0 = arith.constant 0 : index
    %c0_1 = arith.constant 0 : index
    %3 = vector.load %arg2[%c0, %c0_1] : memref<32x128xf32, #tpu.memory_space<vmem>>, vector<32x128xf32>
    %c0_2 = arith.constant 0 : index
    %c0_3 = arith.constant 0 : index
    %4 = vector.load %arg3[%c0_2, %c0_3] : memref<32x128xbf16, #tpu.memory_space<vmem>>, vector<32x128xbf16>
    %5 = arith.extf %4 : vector<32x128xbf16> to vector<32x128xf32>
    %6 = math.absf %3 : vector<32x128xf32>
    %cst = arith.constant 0.000000e+00 : f32
    %7 = vector.broadcast %cst : f32 to vector<32x128xf32>
    %8 = arith.subf %7, %6 : vector<32x128xf32>
    %9 = math.exp %8 : vector<32x128xf32>
    %cst_4 = arith.constant 0.000000e+00 : f32
    %10 = vector.broadcast %cst_4 : f32 to vector<32x128xf32>
    %11 = arith.maximumf %3, %10 : vector<32x128xf32>
    %12 = arith.mulf %3, %5 : vector<32x128xf32>
    %13 = arith.subf %11, %12 : vector<32x128xf32>
    %14 = math.log1p %9 : vector<32x128xf32>
    %15 = arith.addf %13, %14 : vector<32x128xf32>
    %cst_5 = arith.constant 1.000000e+00 : f32
    %16 = vector.broadcast %cst_5 : f32 to vector<32x128xf32>
    %17 = arith.addf %16, %9 : vector<32x128xf32>
    %18 = tpu.reciprocal %17 {approx = true} : vector<32x128xf32> -> vector<32x128xf32>
    %19 = arith.mulf %17, %18 : vector<32x128xf32>
    %cst_6 = arith.constant 2.000000e+00 : f32
    %20 = vector.broadcast %cst_6 : f32 to vector<32x128xf32>
    %21 = arith.subf %20, %19 : vector<32x128xf32>
    %22 = arith.mulf %18, %21 : vector<32x128xf32>
    %23 = arith.mulf %17, %22 : vector<32x128xf32>
    %cst_7 = arith.constant 2.000000e+00 : f32
    %24 = vector.broadcast %cst_7 : f32 to vector<32x128xf32>
    %25 = arith.subf %24, %23 : vector<32x128xf32>
    %26 = arith.mulf %22, %25 : vector<32x128xf32>
    %cst_8 = arith.constant 5.000000e-01 : f32
    %27 = vector.broadcast %cst_8 : f32 to vector<32x128xf32>
    %28 = arith.cmpf ogt, %5, %27 : vector<32x128xf32>
    %cst_9 = arith.constant 0.000000e+00 : f32
    %29 = vector.broadcast %cst_9 : f32 to vector<32x128xf32>
    %30 = arith.cmpf ogt, %3, %29 : vector<32x128xf32>
    %cst_10 = arith.constant 1.000000e+00 : f32
    %31 = vector.broadcast %cst_10 : f32 to vector<32x128xf32>
    %32 = arith.select %30, %31, %9 : vector<32x128xi1>, vector<32x128xf32>
    %cst_11 = arith.constant 0.000000e+00 : f32
    %33 = vector.broadcast %cst_11 : f32 to vector<32x128xf32>
    %34 = arith.cmpf ogt, %3, %33 : vector<32x128xf32>
    %cst_12 = arith.constant 1.000000e+00 : f32
    %35 = vector.broadcast %cst_12 : f32 to vector<32x128xf32>
    %36 = arith.select %34, %9, %35 : vector<32x128xi1>, vector<32x128xf32>
    %37 = arith.select %28, %32, %36 : vector<32x128xi1>, vector<32x128xf32>
    %38 = arith.mulf %37, %26 : vector<32x128xf32>
    %cst_13 = arith.constant 1.000000e+00 : f32
    %39 = vector.broadcast %cst_13 : f32 to vector<32x128xf32>
    %40 = arith.subf %39, %38 : vector<32x128xf32>
    %cst_14 = arith.constant 5.000000e-01 : f32
    %41 = vector.broadcast %cst_14 : f32 to vector<32x128xf32>
    %42 = arith.mulf %41, %5 : vector<32x128xf32>
    %cst_15 = arith.constant 2.500000e-01 : f32
    %43 = vector.broadcast %cst_15 : f32 to vector<32x128xf32>
    %44 = arith.addf %43, %42 : vector<32x128xf32>
    %45 = arith.mulf %40, %40 : vector<32x128xf32>
    %46 = arith.mulf %44, %45 : vector<32x128xf32>
    %47 = arith.mulf %46, %15 : vector<32x128xf32>
    %c1_i32 = arith.constant 1 : i32
    %48 = arith.muli %arg0, %c1_i32 : i32
    %49 = arith.addi %48, %arg1 : i32
    %c4096_i32 = arith.constant 4096 : i32
    %50 = arith.muli %49, %c4096_i32 : i32
    %c1000_i32 = arith.constant 1000 : i32
    %51 = arith.subi %c1000_i32, %50 : i32
    %c4096_i32_16 = arith.constant 4096 : i32
    %52 = arith.cmpi sge, %51, %c4096_i32_16 : i32
    %53 = arith.extui %52 : i1 to i32
    %c0_i32_17 = arith.constant 0 : i32
    %54 = arith.cmpi ne, %53, %c0_i32_17 : i32
    scf.if %54 {
      %c0_20 = arith.constant 0 : index
      %c0_21 = arith.constant 0 : index
      %58 = vector.load %arg4[%c0_20, %c0_21] : memref<8x128xf32, #tpu.memory_space<vmem>>, vector<8x128xf32>
      %59 = vector.shape_cast %47 : vector<32x128xf32> to vector<4x8x128xf32>
      %cst_22 = arith.constant dense<0.000000e+00> : vector<8x128xf32>
      %60 = vector.multi_reduction <add>, %59, %cst_22 [0] : vector<4x8x128xf32> to vector<8x128xf32>
      %61 = arith.addf %58, %60 : vector<8x128xf32>
      %c0_23 = arith.constant 0 : index
      %c0_24 = arith.constant 0 : index
      %62 = vector.load %arg4[%c0_23, %c0_24] : memref<8x128xf32, #tpu.memory_space<vmem>>, vector<8x128xf32>
      tpu.vector_store %arg4[%c0_23, %c0_24], %61 {strides = array<i32>} : memref<8x128xf32, #tpu.memory_space<vmem>>, vector<8x128xf32>,
    } else {
    }
    %c4096_i32_18 = arith.constant 4096 : i32
    %55 = arith.cmpi slt, %51, %c4096_i32_18 : i32
    %56 = arith.extui %55 : i1 to i32
    %c0_i32_19 = arith.constant 0 : i32
    %57 = arith.cmpi ne, %56, %c0_i32_19 : i32
    scf.if %57 {
      %58 = tpu.iota {dimensions = array<i32: 0>} : vector<32x128xi32>
      %59 = tpu.iota {dimensions = array<i32: 1>} : vector<32x128xi32>
      %c128_i32 = arith.constant 128 : i32
      %60 = vector.broadcast %c128_i32 : i32 to vector<32x128xi32>
      %61 = arith.muli %58, %60 : vector<32x128xi32>
      %62 = arith.addi %61, %59 : vector<32x128xi32>
      %63 = vector.broadcast %51 : i32 to vector<32x128xi32>
      %64 = arith.cmpi slt, %62, %63 : vector<32x128xi32>
      %cst_20 = arith.constant 0.000000e+00 : f32
      %65 = vector.broadcast %cst_20 : f32 to vector<32x128xf32>
      %66 = arith.select %64, %47, %65 : vector<32x128xi1>, vector<32x128xf32>
      %c0_21 = arith.constant 0 : index
      %c0_22 = arith.constant 0 : index
      %67 = vector.load %arg4[%c0_21, %c0_22] : memref<8x128xf32, #tpu.memory_space<vmem>>, vector<8x128xf32>
      %68 = vector.shape_cast %66 : vector<32x128xf32> to vector<4x8x128xf32>
      %cst_23 = arith.constant dense<0.000000e+00> : vector<8x128xf32>
      %69 = vector.multi_reduction <add>, %68, %cst_23 [0] : vector<4x8x128xf32> to vector<8x128xf32>
      %70 = arith.addf %67, %69 : vector<8x128xf32>
      %c0_24 = arith.constant 0 : index
      %c0_25 = arith.constant 0 : index
      %71 = vector.load %arg4[%c0_24, %c0_25] : memref<8x128xf32, #tpu.memory_space<vmem>>, vector<8x128xf32>
      tpu.vector_store %arg4[%c0_24, %c0_25], %70 {strides = array<i32>} : memref<8x128xf32, #tpu.memory_space<vmem>>, vector<8x128xf32>,
    } else {
    }
    return
  }
  func.func @transform_0(%arg0: i32, %arg1: i32) -> (i32, i32) {
    %c1_i32 = arith.constant 1 : i32
    %0 = arith.muli %arg0, %c1_i32 : i32
    %1 = arith.addi %0, %arg1 : i32
    %c0_i32 = arith.constant 0 : i32
    %2 = arith.minsi %1, %c0_i32 : i32
    %c0_i32_0 = arith.constant 0 : i32
    %c0_i32_1 = arith.constant 0 : i32
    return %2, %c0_i32_0 : i32, i32
  }
  func.func @transform_1(%arg0: i32, %arg1: i32) -> (i32, i32) {
    %c1_i32 = arith.constant 1 : i32
    %0 = arith.muli %arg0, %c1_i32 : i32
    %1 = arith.addi %0, %arg1 : i32
    %c0_i32 = arith.constant 0 : i32
    %2 = arith.minsi %1, %c0_i32 : i32
    %c0_i32_0 = arith.constant 0 : i32
    %c0_i32_1 = arith.constant 0 : i32
    return %2, %c0_i32_0 : i32, i32
  }
  func.func @transform_2(%arg0: i32, %arg1: i32) -> (i32, i32) {
    %c0_i32 = arith.constant 0 : i32
    %c0_i32_0 = arith.constant 0 : i32
    return %arg0, %c0_i32 : i32, i32
  }
}

</mosaic_0001>

<llo_original>
// kernel: tpu_custom_call.1
$region0: #{tpu_custom_call.1}
  #allocation0 [shape = 'u32[]', space=smem, size = 0x4, offset = 0x4, fixed_abs, tag = 'smem constant byte address 0x4 - core index']
  #allocation1 [shape = 'u32[144,128]{1,0:T(1,128)}', space=vmem, size = 0x12000, scoped, tag = 'internal scratch']
  %s0 = inlined_call_operand.hbm [shape: f32[8,128], index: 0, kind: input, shape index: {}]
  %s1 = inlined_call_operand.hbm [shape: bf16[8,128], index: 1, kind: input, shape index: {}]
  %s2 = inlined_call_operand.hbm [shape: f32[8,128], index: 2, kind: output, shape index: {}]
  %s3 = sld [smem:[#allocation0]]
  $region38: #{tpu_custom_call.1} parent=0
    _
  %s5 = ssub.s32 1, %s3
  %s6 = scalar_select 0, %s5, %s3
  $region1: #{tpu_custom_call.1} parent=0
    #allocation2 [shape = 'u8[16384]{0}', space=vmem, size = 0x4000, scoped, tag = 'input window, operand 0, single buffered']
    #allocation3 [shape = 's32[1]{0}', space=sflag, size = 0x4, scoped, tag = 'scoped memory for tpu_custom_call.1']
    #allocation4 [shape = 's32[1]{0}', space=sflag, size = 0x4, scoped, tag = 'scoped memory for tpu_custom_call.1']
    #allocation5 [shape = 'u8[8192]{0}', space=vmem, size = 0x2000, scoped, tag = 'input window, operand 1, single buffered']
    #allocation6 [shape = 's32[1]{0}', space=sflag, size = 0x4, scoped, tag = 'scoped memory for tpu_custom_call.1']
    #allocation7 [shape = 'u8[4096]{0}', space=vmem, size = 0x1000, scoped, tag = 'output window, operand 0, single buffered']
    %7 = vsyncpa [#allocation3], 0
    %8 = vsyncpa [#allocation6], 0
    %9 = vsyncpa [#allocation4], 0
    // Predicated region
    $region2: #{tpu_custom_call.1} parent=1 // pred_check
      _
    $region3: #{tpu_custom_call.1} parent=1 // pred_check_branch
      %11 = sbr.rel (0) target = $region5
    $region4: #{tpu_custom_call.1} parent=1 // pred_region
      %s12 = sadd.s32 0, 0
      %p13 = scmp.lt.s32.totalorder %s12, 0
      %s14 = scalar_select %p13, %s12, 0
      %s15 = smul.u32 4, %s14
      %s16 = ssub.s32 1, %s15
      %s17 = smul.u32 128, %s16
      %s19 = ssub.s32 512, %s17
      %20 = vsyncadd [#allocation3], %s19
      %p21 = scmp.ne.s32.totalorder 0, %s17
      %s22 = smul.addr %s15, 128
      %s23 = scalar_lea.hbm %s0, %s22
      %s24 = smul.u32 8, %s16
      %s25 = sshll.u32 [#allocation2], 4
      %s26 = int_to_ptr.vmem [resolvable:$true] %s25
      %s27 = sshll.u32 %s24, 4
      %31 = dma.hbm_to_vmem [thread:$0]  (%p21), %s23, %s27, %s26, [#allocation3], 128, 128, 8
    $region5: #{tpu_custom_call.1} parent=1 // pred_fallthru
      _
    // Predicated region
    $region6: #{tpu_custom_call.1} parent=1 // pred_check
      _
    $region7: #{tpu_custom_call.1} parent=1 // pred_check_branch
      %33 = sbr.rel (0) target = $region9
    $region8: #{tpu_custom_call.1} parent=1 // pred_region
      %s34 = sadd.s32 0, 0
      %p35 = scmp.lt.s32.totalorder %s34, 0
      %s36 = scalar_select %p35, %s34, 0
      %s37 = smul.u32 4, %s36
      %s38 = ssub.s32 1, %s37
      %s39 = smul.u32 64, %s38
      %s41 = ssub.s32 256, %s39
      %42 = vsyncadd [#allocation6], %s41
      %p43 = scmp.ne.s32.totalorder 0, %s39
      %s44 = smul.addr %s37, 64
      %s45 = scalar_lea.hbm %s1, %s44
      %s46 = smul.u32 4, %s38
      %s47 = sshll.u32 [#allocation5], 4
      %s48 = int_to_ptr.vmem [resolvable:$true] %s47
      %s49 = sshll.u32 %s46, 4
      %53 = dma.hbm_to_vmem [thread:$0]  (%p43), %s45, %s49, %s48, [#allocation6], 64, 64, 4
    $region9: #{tpu_custom_call.1} parent=1 // pred_fallthru
      _
    // Predicated region
    $region10: #{tpu_custom_call.1} parent=1 // pred_check
      _
    $region11: #{tpu_custom_call.1} parent=1 // pred_check_branch
      %55 = sbr.rel (0) target = $region13
    $region12: #{tpu_custom_call.1} parent=1 // pred_region
      %56 = dma.done [#allocation3], 512
    $region13: #{tpu_custom_call.1} parent=1 // pred_fallthru
      _
    // Predicated region
    $region14: #{tpu_custom_call.1} parent=1 // pred_check
      _
    $region15: #{tpu_custom_call.1} parent=1 // pred_check_branch
      %58 = sbr.rel (0) target = $region17
    $region16: #{tpu_custom_call.1} parent=1 // pred_region
      %59 = dma.done [#allocation6], 256
    $region17: #{tpu_custom_call.1} parent=1 // pred_fallthru
      _
    %s60 = sadd.s32 0, 0
    %p61 = scmp.lt.s32.totalorder %s60, 0
    %s62 = scalar_select %p61, %s60, 0
    %s63 = smul.u32 4, %s62
    %s64 = ssub.s32 1, %s63
    %s65 = smul.u32 128, %s64
    %s66 = sadd.s32 0, 0
    %p67 = scmp.lt.s32.totalorder %s66, 0
    %s68 = scalar_select %p67, %s66, 0
    %s69 = smul.u32 4, %s68
    %s70 = ssub.s32 1, %s69
    %s71 = smul.u32 64, %s70
    %p72 = scmp.eq.s32.totalorder 0, 0
    // Predicated region
    $region18: #{tpu_custom_call.1} parent=1 // pred_check
      %p73 = pneg %p72
    $region19: #{tpu_custom_call.1} parent=1 // pred_check_branch
      %75 = sbr.rel (%p73) target = $region21
    $region20: #{tpu_custom_call.1} parent=1 // pred_region
      %76 = vst [vmem:[#allocation7] sm:$0xff] 0.0
    $region21: #{tpu_custom_call.1} parent=1 // pred_fallthru
      _
    %v77 = vld [vmem:[#allocation2] sm:$0xff]
    %v78 = vld [vmem:[#allocation2 + $0x8] sm:$0xff]
    %v79 = vld [vmem:[#allocation2 + $0x10] sm:$0xff]
    %v80 = vld [vmem:[#allocation2 + $0x18] sm:$0xff]
    %v81 = vld [vmem:[#allocation5] sm:$0xf]
    %v82 = vld [vmem:[#allocation5 + $0x4] sm:$0xf]
    %v83 = vld [vmem:[#allocation5 + $0x8] sm:$0xf]
    %v84 = vld [vmem:[#allocation5 + $0xc] sm:$0xf]
    %v85 = vunpack.c.l.bf16 %v81
    %v86 = vunpack.c.l.bf16 %v82
    %v87 = vunpack.c.l.bf16 %v83
    %v88 = vunpack.c.l.bf16 %v84
    %v89 = vand.u32 2147483647, %v77
    %v90 = vand.u32 2147483647, %v78
    %v91 = vand.u32 2147483647, %v79
    %v92 = vand.u32 2147483647, %v80
    %v93 = vsub.f32 0.0, %v89
    %v94 = vsub.f32 0.0, %v90
    %v95 = vsub.f32 0.0, %v91
    %v96 = vsub.f32 0.0, %v92
    %v97 = vmul.f32 %v93, 1.442695
    %v98 = vpow.pop %v97
    %v99 = vmul.f32 %v94, 1.442695
    %v100 = vpow.pop %v99
    %v101 = vmul.f32 %v95, 1.442695
    %v102 = vpow.pop %v101
    %v103 = vmul.f32 %v96, 1.442695
    %v104 = vpow.pop %v103
    %v105 = vmax.f32 %v77, 0.0
    %v106 = vmax.f32 %v78, 0.0
    %v107 = vmax.f32 %v79, 0.0
    %v108 = vmax.f32 %v80, 0.0
    %v109 = vmul.f32 %v77, %v85
    %v110 = vmul.f32 %v78, %v86
    %v111 = vmul.f32 %v79, %v87
    %v112 = vmul.f32 %v80, %v88
    %v113 = vsub.f32 %v105, %v109
    %v114 = vsub.f32 %v106, %v110
    %v115 = vsub.f32 %v107, %v111
    %v116 = vsub.f32 %v108, %v112
    %v117 = vadd.f32 %v98, 1.0
    %v118 = vlog2.pop %v117
    %v119 = vmul.f32 %v118, 0.6931472
    %v120 = vmul.f32 -0.5, %v98
    %v121 = vadd.f32 %v120, 1.0
    %v122 = vmul.f32 %v121, %v98
    %v123 = vand.u32 2147483647, %v98
    %vm124 = vcmp.lt.f32.partialorder %v123, 0.0004427343
    %v125 = vsel %vm124, %v122, %v119
    %v126 = vadd.f32 %v100, 1.0
    %v127 = vlog2.pop %v126
    %v128 = vmul.f32 %v127, 0.6931472
    %v129 = vmul.f32 -0.5, %v100
    %v130 = vadd.f32 %v129, 1.0
    %v131 = vmul.f32 %v130, %v100
    %v132 = vand.u32 2147483647, %v100
    %vm133 = vcmp.lt.f32.partialorder %v132, 0.0004427343
    %v134 = vsel %vm133, %v131, %v128
    %v135 = vadd.f32 %v102, 1.0
    %v136 = vlog2.pop %v135
    %v137 = vmul.f32 %v136, 0.6931472
    %v138 = vmul.f32 -0.5, %v102
    %v139 = vadd.f32 %v138, 1.0
    %v140 = vmul.f32 %v139, %v102
    %v141 = vand.u32 2147483647, %v102
    %vm142 = vcmp.lt.f32.partialorder %v141, 0.0004427343
    %v143 = vsel %vm142, %v140, %v137
    %v144 = vadd.f32 %v104, 1.0
    %v145 = vlog2.pop %v144
    %v146 = vmul.f32 %v145, 0.6931472
    %v147 = vmul.f32 -0.5, %v104
    %v148 = vadd.f32 %v147, 1.0
    %v149 = vmul.f32 %v148, %v104
    %v150 = vand.u32 2147483647, %v104
    %vm151 = vcmp.lt.f32.partialorder %v150, 0.0004427343
    %v152 = vsel %vm151, %v149, %v146
    %v153 = vadd.f32 %v113, %v125
    %v154 = vadd.f32 %v114, %v134
    %v155 = vadd.f32 %v115, %v143
    %v156 = vadd.f32 %v116, %v152
    %v157 = vadd.f32 %v98, 1.0
    %v158 = vadd.f32 %v100, 1.0
    %v159 = vadd.f32 %v102, 1.0
    %v160 = vadd.f32 %v104, 1.0
    %v161 = vrcp.pop %v157
    %v162 = vrcp.pop %v158
    %v163 = vrcp.pop %v159
    %v164 = vrcp.pop %v160
    %v165 = vmul.f32 %v157, %v161
    %v166 = vmul.f32 %v158, %v162
    %v167 = vmul.f32 %v159, %v163
    %v168 = vmul.f32 %v160, %v164
    %v169 = vsub.f32 2.0, %v165
    %v170 = vsub.f32 2.0, %v166
    %v171 = vsub.f32 2.0, %v167
    %v172 = vsub.f32 2.0, %v168
    %v173 = vmul.f32 %v161, %v169
    %v174 = vmul.f32 %v162, %v170
    %v175 = vmul.f32 %v163, %v171
    %v176 = vmul.f32 %v164, %v172
    %v177 = vmul.f32 %v157, %v173
    %v178 = vmul.f32 %v158, %v174
    %v179 = vmul.f32 %v159, %v175
    %v180 = vmul.f32 %v160, %v176
    %v181 = vsub.f32 2.0, %v177
    %v182 = vsub.f32 2.0, %v178
    %v183 = vsub.f32 2.0, %v179
    %v184 = vsub.f32 2.0, %v180
    %v185 = vmul.f32 %v173, %v181
    %v186 = vmul.f32 %v174, %v182
    %v187 = vmul.f32 %v175, %v183
    %v188 = vmul.f32 %v176, %v184
    %vm189 = vcmp.gt.f32.partialorder %v85, 0.5
    %vm190 = vcmp.gt.f32.partialorder %v86, 0.5
    %vm191 = vcmp.gt.f32.partialorder %v87, 0.5
    %vm192 = vcmp.gt.f32.partialorder %v88, 0.5
    %vm193 = vcmp.gt.f32.partialorder %v77, 0.0
    %vm194 = vcmp.gt.f32.partialorder %v78, 0.0
    %vm195 = vcmp.gt.f32.partialorder %v79, 0.0
    %vm196 = vcmp.gt.f32.partialorder %v80, 0.0
    %v197 = vsel %vm193, 1.0, %v98
    %v198 = vsel %vm194, 1.0, %v100
    %v199 = vsel %vm195, 1.0, %v102
    %v200 = vsel %vm196, 1.0, %v104
    %v201 = vsel %vm193, %v98, 1.0
    %v202 = vsel %vm194, %v100, 1.0
    %v203 = vsel %vm195, %v102, 1.0
    %v204 = vsel %vm196, %v104, 1.0
    %v205 = vsel %vm189, %v197, %v201
    %v206 = vsel %vm190, %v198, %v202
    %v207 = vsel %vm191, %v199, %v203
    %v208 = vsel %vm192, %v200, %v204
    %v209 = vmul.f32 %v205, %v185
    %v210 = vmul.f32 %v206, %v186
    %v211 = vmul.f32 %v207, %v187
    %v212 = vmul.f32 %v208, %v188
    %v213 = vsub.f32 1.0, %v209
    %v214 = vsub.f32 1.0, %v210
    %v215 = vsub.f32 1.0, %v211
    %v216 = vsub.f32 1.0, %v212
    %v217 = vmul.f32 %v85, 0.5
    %v218 = vmul.f32 %v86, 0.5
    %v219 = vmul.f32 %v87, 0.5
    %v220 = vmul.f32 %v88, 0.5
    %v221 = vadd.f32 %v217, 0.25
    %v222 = vadd.f32 %v218, 0.25
    %v223 = vadd.f32 %v219, 0.25
    %v224 = vadd.f32 %v220, 0.25
    %v225 = vmul.f32 %v213, %v213
    %v226 = vmul.f32 %v214, %v214
    %v227 = vmul.f32 %v215, %v215
    %v228 = vmul.f32 %v216, %v216
    %v229 = vmul.f32 %v221, %v225
    %v230 = vmul.f32 %v222, %v226
    %v231 = vmul.f32 %v223, %v227
    %v232 = vmul.f32 %v224, %v228
    %v233 = vmul.f32 %v229, %v153
    %v234 = vmul.f32 %v230, %v154
    %v235 = vmul.f32 %v231, %v155
    %v236 = vmul.f32 %v232, %v156
    %s237 = sadd.s32 0, 0
    %s238 = smul.u32 %s237, 4096
    %s239 = ssub.s32 1000, %s238
    %p240 = scmp.ge.s32.totalorder %s239, 4096
    // Predicated region
    $region22: #{tpu_custom_call.1} parent=1 // pred_check
      %p241 = pneg %p240
    $region23: #{tpu_custom_call.1} parent=1 // pred_check_branch
      %243 = sbr.rel (%p241) target = $region25
    $region24: #{tpu_custom_call.1} parent=1 // pred_region
      %v244 = vld [vmem:[#allocation7] sm:$0xff]
      %v245 = vadd.f32 %v233, %v234
      %v246 = vadd.f32 %v245, %v235
      %v247 = vadd.f32 %v246, %v236
      %v248 = vadd.f32 %v244, %v247
      %249 = vst [vmem:[#allocation7] sm:$0xff] %v248
    $region25: #{tpu_custom_call.1} parent=1 // pred_fallthru
      _
    %p250 = scmp.lt.s32.totalorder %s239, 4096
    // Predicated region
    $region26: #{tpu_custom_call.1} parent=1 // pred_check
      %p251 = pneg %p250
    $region27: #{tpu_custom_call.1} parent=1 // pred_check_branch
      %253 = sbr.rel (%p251) target = $region29
    $region28: #{tpu_custom_call.1} parent=1 // pred_region
      %v254 = vlaneseq
      %v255 = vshrl.u32 %v254, 7
      %v256 = vadd.s32 %v255, 8
      %v257 = vadd.s32 %v255, 16
      %v258 = vadd.s32 %v255, 24
      %v259 = vlaneseq
      %v260 = vand.u32 %v259, 127
      %v261 = vmul.u32 %v255, 128
      %v262 = vmul.u32 %v256, 128
      %v263 = vmul.u32 %v257, 128
      %v264 = vmul.u32 %v258, 128
      %v265 = vadd.s32 %v261, %v260
      %v266 = vadd.s32 %v262, %v260
      %v267 = vadd.s32 %v263, %v260
      %v268 = vadd.s32 %v264, %v260
      %v269 = vstv %s239
      %vm270 = vcmp.lt.s32.totalorder %v265, %v269
      %vm271 = vcmp.lt.s32.totalorder %v266, %v269
      %vm272 = vcmp.lt.s32.totalorder %v267, %v269
      %vm273 = vcmp.lt.s32.totalorder %v268, %v269
      %v274 = vsel %vm270, %v233, 0.0
      %v275 = vsel %vm271, %v234, 0.0
      %v276 = vsel %vm272, %v235, 0.0
      %v277 = vsel %vm273, %v236, 0.0
      %v278 = vld [vmem:[#allocation7] sm:$0xff]
      %v279 = vadd.f32 %v274, %v275
      %v280 = vadd.f32 %v279, %v276
      %v281 = vadd.f32 %v280, %v277
      %v282 = vadd.f32 %v278, %v281
      %283 = vst [vmem:[#allocation7] sm:$0xff] %v282
    $region29: #{tpu_custom_call.1} parent=1 // pred_fallthru
      _
    // Predicated region
    $region30: #{tpu_custom_call.1} parent=1 // pred_check
      _
    $region31: #{tpu_custom_call.1} parent=1 // pred_check_branch
      %285 = sbr.rel (0) target = $region33
    $region32: #{tpu_custom_call.1} parent=1 // pred_region
      %s287 = ssub.s32 128, 128
      %288 = vsyncadd [#allocation4], %s287
      %s290 = sshll.u32 [#allocation7], 4
      %s291 = int_to_ptr.vmem [resolvable:$true] %s290
      %293 = dma.vmem_to_hbm [thread:$0]  %s291, 128, %s2, [#allocation4]
    $region33: #{tpu_custom_call.1} parent=1 // pred_fallthru
      _
    // Predicated region
    $region34: #{tpu_custom_call.1} parent=1 // pred_check
      _
    $region35: #{tpu_custom_call.1} parent=1 // pred_check_branch
      %295 = sbr.rel (0) target = $region37
    $region36: #{tpu_custom_call.1} parent=1 // pred_region
      %296 = dma.done [#allocation4], 128
    $region37: #{tpu_custom_call.1} parent=1 // pred_fallthru
      _
    %297 = vsyncpa [#allocation3], 1
    %298 = vsyncpa [#allocation6], 1
    %299 = vsyncpa [#allocation4], 1

</llo_original>
